<compile_context>
chip_gen: v7x
topology: tpu7x:2x2x1
jax: 0.10.0
libtpu: 0.0.40
codegen_flags: <defaults>
</compile_context>

<pallas_src>
import functools

import jax
import jax.numpy as jnp
from jax.experimental import pallas as pl
from jax.experimental.pallas import tpu as pltpu

_TARGET_TILE_BYTES = 8 * 1024 * 1024     # per (single-buffer) input tile


def _round_up(x, m):
    return ((x + m - 1) // m) * m


def _tpu_generation_info():
    """Best-effort (vmem_capacity_bytes, tensorcores_per_chip); conservative defaults."""
    vmem_bytes = 64 * 1024 * 1024        # conservative (v7x-sized) default
    num_tc = 1
    try:
        info = pltpu.get_tpu_info()
        v = getattr(info, "vmem_capacity_bytes", None)
        if isinstance(v, int) and v > 0:
            vmem_bytes = v
        for attr in ("num_cores", "tensorcores_per_chip", "cores_per_chip",
                     "num_tensorcores", "core_count"):
            c = getattr(info, attr, None)
            if isinstance(c, int) and 1 <= c <= 8:
                num_tc = c
                break
    except Exception:
        pass
    return vmem_bytes, num_tc


def _vmem_budgets(vmem_bytes):
    """(tile_budget, vmem_limit) for the pallas_call, sized to the chip generation."""
    if vmem_bytes >= 100 * 1024 * 1024:          # v5e / v6e: 128 MiB physical
        return 48 * 1024 * 1024, 96 * 1024 * 1024
    return 24 * 1024 * 1024, 48 * 1024 * 1024    # v7x: 64 MiB physical (shared w/ scratch)


def _pick_tm(rows, h, itemsize, tile_budget, num_tc):
    """Row-tile: largest byte-sized tile that fits the VMEM budget, never > rows."""
    sub = 8 if itemsize >= 4 else 16
    # VMEM per row of tile: 2x double-buffered input + 2x double-buffered output
    # (itemsize each) plus the f32 intermediates (upcast + centered copy) that
    # live in VMEM once the tile exceeds the 256 KiB vreg file.
    per_row = 4 * h * itemsize + 2 * h * 4
    tm = min(max(1, tile_budget // max(per_row, 1)),
             max(1, _TARGET_TILE_BYTES // max(h * itemsize, 1)))
    if num_tc > 1 and rows > 2 * num_tc * sub:
        # >= 2 grid steps per TensorCore for core-parallel sharding, but never
        # shrink the tile below ~1 MiB of input.
        min_rows = max(sub, (1 << 20) // max(h * itemsize, 1))
        tm = min(tm, max(-(-rows // (2 * num_tc)), min_rows))
    if tm >= rows:
        return rows                       # one block spanning the full row axis (always legal)
    tm = max(sub, (tm // sub) * sub)      # sublane-aligned
    return min(tm, rows)                  # never exceed the array dim


def _layernorm_kernel(x_ref, wb_ref, o_ref, *, eps, inv_h):
    # x_ref: (tm, H) row tile; wb_ref: (2, H) f32 with row 0 = weight, row 1 = bias.
    x = x_ref[...].astype(jnp.float32)
    mean = jnp.sum(x, axis=-1, keepdims=True) * inv_h
    xc = x - mean
    var = jnp.sum(xc * xc, axis=-1, keepdims=True) * inv_h   # biased (torch) variance
    inv = jax.lax.rsqrt(var + eps)
    wb = wb_ref[...]
    w = wb[0:1, :]
    b = wb[1:2, :]
    o_ref[...] = (xc * inv * w + b).astype(o_ref.dtype)


def layer_norm(x, weight, bias, eps=1e-5, *, tm=None):
    """LayerNorm over the last axis of x (Encoder.norm). x: (..., H); weight/bias: (H,)."""
    orig_shape = x.shape
    H = orig_shape[-1]
    rows = 1
    for d in orig_shape[:-1]:
        rows *= d
    x2 = x.reshape(rows, H)

    # Pack weight/bias into one resident (2, H) f32 block (single param DMA).
    wb = jnp.stack([weight.astype(jnp.float32), bias.astype(jnp.float32)], axis=0)

    vmem_bytes, num_tc = _tpu_generation_info()
    tile_budget, vmem_limit = _vmem_budgets(vmem_bytes)
    if tm is None:
        tm = _pick_tm(rows, H, x.dtype.itemsize, tile_budget, num_tc)
    n_steps = -(-rows // tm)

    if num_tc > 1:
        row_sem = getattr(pltpu, "CORE_PARALLEL", "parallel")
    else:
        row_sem = "parallel"

    out = pl.pallas_call(
        functools.partial(_layernorm_kernel, eps=float(eps), inv_h=1.0 / H),
        out_shape=jax.ShapeDtypeStruct((rows, H), x.dtype),
        grid_spec=pltpu.PrefetchScalarGridSpec(
            num_scalar_prefetch=0,
            grid=(n_steps,),
            in_specs=[
                pl.BlockSpec((tm, H), lambda i: (i, 0)),     # row tile (last block may be partial)
                pl.BlockSpec((2, H), lambda i: (0, 0)),      # resident packed weight/bias
            ],
            out_specs=pl.BlockSpec((tm, H), lambda i: (i, 0)),
        ),
        compiler_params=pltpu.CompilerParams(
            dimension_semantics=(row_sem,),
            vmem_limit_bytes=int(vmem_limit),
        ),
    )(x2, wb)

    return out.reshape(orig_shape)


def _reference_layer_norm(x, weight, bias, eps=1e-5):
    u = jnp.mean(x, axis=-1, keepdims=True)
    s = jnp.mean((x - u) ** 2, axis=-1, keepdims=True)
    return weight * ((x - u) / jnp.sqrt(s + eps)) + bias


if __name__ == "__main__":
    key = jax.random.PRNGKey(0)
    k0, k1, k2 = jax.random.split(key, 3)

    # Shape the Encoder's final norm sees: [A, T*S, D] = [2, 8, 32].
    batch, seq, hidden = 2, 8, 32
    x = jax.random.normal(k0, (batch, seq, hidden), dtype=jnp.float32)
    weight = jnp.ones((hidden,), dtype=jnp.float32)    # nn.LayerNorm default init
    bias = jnp.zeros((hidden,), dtype=jnp.float32)
    out = jax.block_until_ready(layer_norm(x, weight, bias, eps=1e-5))
    ref = _reference_layer_norm(x, weight, bias, eps=1e-5)
    assert out.shape == x.shape
    assert jnp.allclose(out, ref, atol=1e-5, rtol=1e-5), "mismatch vs reference (small)"

    # Ragged row count (exercises the partial last block) + lane-dense hidden
    # + non-trivial affine params.
    xa = jax.random.normal(k1, (3, 50, 256), dtype=jnp.float32)
    w2 = 0.5 + 0.01 * jnp.arange(256, dtype=jnp.float32)
    b2 = 0.1 * jnp.ones((256,), dtype=jnp.float32)
    out2 = jax.block_until_ready(layer_norm(xa, w2, b2, eps=1e-5))
    ref2 = _reference_layer_norm(xa, w2, b2, eps=1e-5)
    assert jnp.allclose(out2, ref2, atol=1e-5, rtol=1e-5), "mismatch vs reference (ragged)"

    # bf16 activations (f32 params): two-pass f32 stats inside the kernel.
    xb = jax.random.normal(k2, (4, 64, 128), dtype=jnp.float32).astype(jnp.bfloat16)
    w3 = jnp.ones((128,), dtype=jnp.float32)
    b3 = jnp.zeros((128,), dtype=jnp.float32)
    out3 = jax.block_until_ready(layer_norm(xb, w3, b3, eps=1e-5))
    ref3 = _reference_layer_norm(xb.astype(jnp.float32), w3, b3, eps=1e-5)
    assert out3.dtype == jnp.bfloat16
    assert jnp.allclose(out3.astype(jnp.float32), ref3, atol=3e-2, rtol=3e-2), \
        "mismatch vs reference (bf16)"

    print("KERNEL_OK")
</pallas_src>

<mosaic_0001>
module attributes {stable_mosaic.version = 11 : i64} {
  func.func @_layernorm_kernel(%arg0: i32, %arg1: memref<16x32xf32, #tpu.memory_space<vmem>>, %arg2: memref<2x32xf32, #tpu.memory_space<vmem>>, %arg3: memref<16x32xf32, #tpu.memory_space<vmem>>) attributes {dimension_semantics = [#tpu.dimension_semantics<parallel>], iteration_bounds = array<i64: 1>, scalar_prefetch = 0 : i64, scratch_operands = 0 : i64, tpu.core_type = #tpu.core_type<tc>, window_params = [{transform_indices = @transform_0, window_bounds = array<i64: 16, 32>}, {pipeline_mode = #tpu.pipeline_mode<synchronous>, transform_indices = @transform_1, window_bounds = array<i64: 2, 32>}, {transform_indices = @transform_2, window_bounds = array<i64: 16, 32>}]} {
    %c0 = arith.constant 0 : index
    %c0_0 = arith.constant 0 : index
    %0 = vector.load %arg1[%c0, %c0_0] : memref<16x32xf32, #tpu.memory_space<vmem>>, vector<16x32xf32>
    %cst = arith.constant dense<0.000000e+00> : vector<16xf32>
    %1 = vector.multi_reduction <add>, %0, %cst [1] : vector<16x32xf32> to vector<16xf32>
    %2 = vector.shape_cast %1 : vector<16xf32> to vector<16x1xf32>
    %cst_1 = arith.constant 3.125000e-02 : f32
    %3 = vector.broadcast %cst_1 : f32 to vector<16x1xf32>
    %4 = arith.mulf %2, %3 : vector<16x1xf32>
    %5 = vector.broadcast %4 : vector<16x1xf32> to vector<16x32xf32>
    %6 = arith.subf %0, %5 : vector<16x32xf32>
    %7 = arith.mulf %6, %6 : vector<16x32xf32>
    %cst_2 = arith.constant dense<0.000000e+00> : vector<16xf32>
    %8 = vector.multi_reduction <add>, %7, %cst_2 [1] : vector<16x32xf32> to vector<16xf32>
    %9 = vector.shape_cast %8 : vector<16xf32> to vector<16x1xf32>
    %cst_3 = arith.constant 3.125000e-02 : f32
    %10 = vector.broadcast %cst_3 : f32 to vector<16x1xf32>
    %11 = arith.mulf %9, %10 : vector<16x1xf32>
    %cst_4 = arith.constant 9.99999974E-6 : f32
    %12 = vector.broadcast %cst_4 : f32 to vector<16x1xf32>
    %13 = arith.addf %11, %12 : vector<16x1xf32>
    %14 = math.rsqrt %13 : vector<16x1xf32>
    %c0_5 = arith.constant 0 : index
    %c0_6 = arith.constant 0 : index
    %15 = vector.load %arg2[%c0_5, %c0_6] : memref<2x32xf32, #tpu.memory_space<vmem>>, vector<2x32xf32>
    %16 = vector.extract_strided_slice %15 {offsets = [0, 0], sizes = [1, 32], strides = [1, 1]} : vector<2x32xf32> to vector<1x32xf32>
    %17 = vector.extract_strided_slice %15 {offsets = [1, 0], sizes = [1, 32], strides = [1, 1]} : vector<2x32xf32> to vector<1x32xf32>
    %18 = vector.broadcast %14 : vector<16x1xf32> to vector<16x32xf32>
    %19 = arith.mulf %6, %18 : vector<16x32xf32>
    %20 = vector.broadcast %16 : vector<1x32xf32> to vector<16x32xf32>
    %21 = arith.mulf %19, %20 : vector<16x32xf32>
    %22 = vector.broadcast %17 : vector<1x32xf32> to vector<16x32xf32>
    %23 = arith.addf %21, %22 : vector<16x32xf32>
    %c0_7 = arith.constant 0 : index
    %c0_8 = arith.constant 0 : index
    %24 = vector.load %arg3[%c0_7, %c0_8] : memref<16x32xf32, #tpu.memory_space<vmem>>, vector<16x32xf32>
    tpu.vector_store %arg3[%c0_7, %c0_8], %23 {strides = array<i32>} : memref<16x32xf32, #tpu.memory_space<vmem>>, vector<16x32xf32>,
    return
  }
  func.func @transform_0(%arg0: i32) -> (i32, i32) {
    %c0_i32 = arith.constant 0 : i32
    %c0_i32_0 = arith.constant 0 : i32
    return %arg0, %c0_i32 : i32, i32
  }
  func.func @transform_1(%arg0: i32) -> (i32, i32) {
    %c0_i32 = arith.constant 0 : i32
    %c0_i32_0 = arith.constant 0 : i32
    %c0_i32_1 = arith.constant 0 : i32
    return %c0_i32, %c0_i32_0 : i32, i32
  }
  func.func @transform_2(%arg0: i32) -> (i32, i32) {
    %c0_i32 = arith.constant 0 : i32
    %c0_i32_0 = arith.constant 0 : i32
    return %arg0, %c0_i32 : i32, i32
  }
}

</mosaic_0001>

<llo_original>
// kernel: tpu_custom_call.1
$region0: #{tpu_custom_call.1}
  #allocation0 [shape = 'u32[]', space=smem, size = 0x4, offset = 0x4, fixed_abs, tag = 'smem constant byte address 0x4 - core index']
  #allocation1 [shape = 'u32[144,128]{1,0:T(1,128)}', space=vmem, size = 0x12000, scoped, tag = 'internal scratch']
  %s0 = inlined_call_operand.hbm [shape: f32[16,32], index: 0, kind: input, shape index: {}]
  %s1 = inlined_call_operand.vmem [shape: f32[2,32], index: 1, kind: input, shape index: {}]
  %s2 = inlined_call_operand.hbm [shape: f32[16,32], index: 2, kind: output, shape index: {}]
  %s3 = sld [smem:[#allocation0]]
  $region22: #{tpu_custom_call.1} parent=0
    _
  %s5 = ssub.s32 1, %s3
  %s6 = scalar_select 0, %s5, %s3
  $region1: #{tpu_custom_call.1} parent=0
    #allocation2 [shape = 'u8[8192]{0}', space=vmem, size = 0x2000, scoped, tag = 'input window, operand 0, single buffered']
    #allocation3 [shape = 's32[1]{0}', space=sflag, size = 0x4, scoped, tag = 'scoped memory for tpu_custom_call.1']
    #allocation4 [shape = 's32[1]{0}', space=sflag, size = 0x4, scoped, tag = 'scoped memory for tpu_custom_call.1']
    #allocation5 [shape = 'u8[8192]{0}', space=vmem, size = 0x2000, scoped, tag = 'output window, operand 0, single buffered']
    %7 = vsyncpa [#allocation3], 0
    %8 = vsyncpa [#allocation4], 0
    // Predicated region
    $region2: #{tpu_custom_call.1} parent=1 // pred_check
      _
    $region3: #{tpu_custom_call.1} parent=1 // pred_check_branch
      %10 = sbr.rel (0) target = $region5
    $region4: #{tpu_custom_call.1} parent=1 // pred_region
      %s12 = ssub.s32 256, 256
      %13 = vsyncadd [#allocation3], %s12
      %s14 = sshll.u32 [#allocation2], 4
      %s15 = int_to_ptr.vmem [resolvable:$true] %s14
      %20 = dma.hbm_to_vmem [thread:$0]  %s0, 256, %s15, [#allocation3], 128, 128, 8
    $region5: #{tpu_custom_call.1} parent=1 // pred_fallthru
      _
    // Predicated region
    $region6: #{tpu_custom_call.1} parent=1 // pred_check
      _
    $region7: #{tpu_custom_call.1} parent=1 // pred_check_branch
      %22 = sbr.rel (0) target = $region9
    $region8: #{tpu_custom_call.1} parent=1 // pred_region
      _
    $region9: #{tpu_custom_call.1} parent=1 // pred_fallthru
      _
    // Predicated region
    $region10: #{tpu_custom_call.1} parent=1 // pred_check
      _
    $region11: #{tpu_custom_call.1} parent=1 // pred_check_branch
      %24 = sbr.rel (0) target = $region13
    $region12: #{tpu_custom_call.1} parent=1 // pred_region
      %25 = dma.done [#allocation3], 256
    $region13: #{tpu_custom_call.1} parent=1 // pred_fallthru
      _
    %v26 = vld [vmem:[#allocation2] sm:$0xff]
    %v27 = vld [vmem:[#allocation2 + $0x8] sm:$0xff]
    %vm28 = vcmask 261120
    %v29 = vsel %vm28, %v26, 0.0
    %30 = vadd.xlane.f32.xlu0 %v29
    %v31 = vpop.xlane.xlu0 %30
    %v32 = vsel %vm28, %v27, 0.0
    %33 = vadd.xlane.f32.xlu0 %v32
    %v34 = vpop.xlane.xlu0 %33
    %v35 = vmul.f32 %v31, 0.03125
    %v36 = vmul.f32 %v34, 0.03125
    %v37 = vsub.f32 %v26, %v35
    %v38 = vsub.f32 %v27, %v36
    %v39 = vmul.f32 %v37, %v37
    %v40 = vmul.f32 %v38, %v38
    %v41 = vsel %vm28, %v39, 0.0
    %42 = vadd.xlane.f32.xlu0 %v41
    %v43 = vpop.xlane.xlu0 %42
    %v44 = vsel %vm28, %v40, 0.0
    %45 = vadd.xlane.f32.xlu0 %v44
    %v46 = vpop.xlane.xlu0 %45
    %v47 = vmul.f32 %v43, 0.03125
    %v48 = vmul.f32 %v46, 0.03125
    %v49 = vadd.f32 %v47, 1e-05
    %v50 = vadd.f32 %v48, 1e-05
    %v51 = vrsqrt.pop %v49
    %v52 = vrsqrt.pop %v50
    %v53 = vld [vmem:[%s1] sm:$0x3]
    %v54 = vmul.f32 %v37, %v51
    %v55 = vmul.f32 %v38, %v52
    %v56 = vlaneseq
    %v57 = vshrl.u32 %v56, 7
    %v58 = vsub.s32 0, %v57
    %v59 = vrot.slane %v53, %v58
    %v60 = vmul.f32 %v54, %v59
    %v61 = vmul.f32 %v55, %v59
    %v62 = vlaneseq
    %v63 = vshrl.u32 %v62, 7
    %v64 = vsub.s32 1, %v63
    %v65 = vrot.slane %v53, %v64
    %v66 = vadd.f32 %v60, %v65
    %v67 = vadd.f32 %v61, %v65
    %68 = vst.msk [vmem:[#allocation5] sm:$0xff] %vm28, %v66
    %69 = vst.msk [vmem:[#allocation5 + $0x8] sm:$0xff] %vm28, %v67
    // Predicated region
    $region14: #{tpu_custom_call.1} parent=1 // pred_check
      _
    $region15: #{tpu_custom_call.1} parent=1 // pred_check_branch
      %71 = sbr.rel (0) target = $region17
    $region16: #{tpu_custom_call.1} parent=1 // pred_region
      %s73 = ssub.s32 256, 256
      %74 = vsyncadd [#allocation4], %s73
      %s75 = sshll.u32 [#allocation5], 4
      %s76 = int_to_ptr.vmem [resolvable:$true] %s75
      %81 = dma.vmem_to_hbm [thread:$0]  %s76, 256, %s2, [#allocation4], 128, 128, 8
    $region17: #{tpu_custom_call.1} parent=1 // pred_fallthru
      _
    // Predicated region
    $region18: #{tpu_custom_call.1} parent=1 // pred_check
      _
    $region19: #{tpu_custom_call.1} parent=1 // pred_check_branch
      %83 = sbr.rel (0) target = $region21
    $region20: #{tpu_custom_call.1} parent=1 // pred_region
      %84 = dma.done [#allocation4], 256
    $region21: #{tpu_custom_call.1} parent=1 // pred_fallthru
      _
    %85 = vsyncpa [#allocation3], 1
    %86 = vsyncpa [#allocation4], 1

</llo_original>
